<compile_context>
chip_gen: v6e
topology: v6e:2x2x1
jax: 0.10.0
libtpu: 0.0.40
codegen_flags: <defaults>
</compile_context>

<pallas_src>
import jax
import jax.numpy as jnp
from jax.experimental import pallas as pl
from jax.experimental.pallas import tpu as pltpu

_LANE = 128
_SUBLANE = 8
_MIN_TILE = _LANE * _SUBLANE  # 1024 elements -> one full (8,128) f32 vreg


def _cdiv(a: int, b: int) -> int:
    return -(-a // b)


def _make_outconv_kernel(cin: int, cout: int):
    def kernel(x_ref, w_ref, b_ref, o_ref):
        # x_ref: (cin, tr, 128)  VMEM block (one batch element, one L tile)
        # w_ref: (cout, cin) f32, whole (tiny) array resident in SMEM
        # b_ref: (cout,)     f32, SMEM
        # o_ref: (cout, tr, 128) VMEM block
        xs = [x_ref[ci] for ci in range(cin)]           # each (tr, 128), dense
        for co in range(cout):
            acc = xs[0] * w_ref[co, 0]
            for ci in range(1, cin):
                acc = acc + xs[ci] * w_ref[co, ci]
            # Direct per-channel lane-dense slab store (no concatenate temp).
            o_ref[co] = (acc + b_ref[co]).astype(o_ref.dtype)

    return kernel


def out_conv(x, weight, bias, *, max_l_tile: int = 131072):
    """Pointwise (kernel_size=1) Conv1d, NCL layout in and out.

    Args:
      x:      (N, Cin, L)    float32, NCL layout (as PyTorch).
      weight: (Cout, Cin, 1) float32 (PyTorch Conv1d weight shape).
      bias:   (Cout,)        float32.
    Returns:
      (N, Cout, L) float32.
    """
    n, cin, length = x.shape
    cout = weight.shape[0]
    itemsize = jnp.dtype(x.dtype).itemsize

    # Pad L so every store is lane-dense (unmasked vst), then fold L into
    # (L/128, 128) to fill all 8 sublanes of each vreg.
    l_pad = _cdiv(length, _LANE) * _LANE
    if l_pad != length:
        x = jnp.pad(x, ((0, 0), (0, 0), (0, l_pad - length)))

    # L-tile selection: full padded L if it fits, else a multiple of 1024.
    if l_pad <= max_l_tile:
        tl = l_pad
    else:
        tl = max_l_tile - (max_l_tile % _MIN_TILE)
    # Guarantee >=2 grid programs so v7x's two TensorCores both get work.
    while n * _cdiv(l_pad, tl) < 2 and tl >= 2 * _MIN_TILE:
        tl = _cdiv(tl // 2, _MIN_TILE) * _MIN_TILE

    tr = tl // _LANE                                 # sublane rows per tile
    num_l_tiles = _cdiv(l_pad // _LANE, tr)
    grid = (n, num_l_tiles)

    xr = x.reshape(n, cin, l_pad // _LANE, _LANE)
    w2 = weight[:, :, 0].astype(jnp.float32)         # (Cout, Cin) -> SMEM
    b = bias.astype(jnp.float32)                     # (Cout,)     -> SMEM

    # VMEM budget: account for sublane padding of the (tr,128) tiles and
    # multi-buffering; generous floor, well under v7x's 64 MiB ceiling.
    tr_pad = max(_SUBLANE, _cdiv(tr, _SUBLANE) * _SUBLANE)
    blk_bytes = (cin + cout) * tr_pad * _LANE * itemsize
    vmem_limit = int(min(max(5 * blk_bytes + (4 << 20), 16 << 20), 48 << 20))

    cost = pl.CostEstimate(
        flops=2 * n * l_pad * cin * cout,
        transcendentals=0,
        bytes_accessed=itemsize * (n * cin * l_pad + n * cout * l_pad)
        + 4 * (cout * cin + cout),
    )

    x_spec_kwargs = {}
    if num_l_tiles >= 3:
        # Deeper input pipelining only pays off when several L tiles exist.
        x_spec_kwargs["pipeline_mode"] = pl.Buffered(3)

    y = pl.pallas_call(
        _make_outconv_kernel(cin, cout),
        out_shape=jax.ShapeDtypeStruct((n, cout, l_pad // _LANE, _LANE), x.dtype),
        grid=grid,
        in_specs=[
            pl.BlockSpec((None, cin, tr, _LANE),
                         lambda ni, li: (ni, 0, li, 0), **x_spec_kwargs),
            pl.BlockSpec(memory_space=pltpu.MemorySpace.SMEM),
            pl.BlockSpec(memory_space=pltpu.MemorySpace.SMEM),
        ],
        out_specs=pl.BlockSpec((None, cout, tr, _LANE),
                               lambda ni, li: (ni, 0, li, 0)),
        compiler_params=pltpu.CompilerParams(
            dimension_semantics=("parallel", "parallel"),
            vmem_limit_bytes=vmem_limit,
        ),
        cost_estimate=cost,
    )(xr, w2, b)

    return y.reshape(n, cout, l_pad)[:, :, :length]


if __name__ == "__main__":
    # Deterministic synthetic parameters + input (no checkpoint loading).
    in_channels, out_channels = 4, 3
    N, L = 2, 16

    key = jax.random.PRNGKey(0)
    kx, kw, kb = jax.random.split(key, 3)

    x = jax.random.normal(kx, (N, in_channels, L), dtype=jnp.float32)
    weight = jax.random.normal(
        kw, (out_channels, in_channels, 1), dtype=jnp.float32) * 0.1
    bias = jax.random.normal(kb, (out_channels,), dtype=jnp.float32) * 0.1

    y = out_conv(x, weight, bias)
    y = jax.block_until_ready(y)

    # Pure-JAX reference (same math as nn.Conv1d with kernel_size=1).
    ref = jnp.einsum("ncl,oc->nol", x, weight[:, :, 0]) + bias[None, :, None]
    assert y.shape == (N, out_channels, L), y.shape
    assert jnp.allclose(y, ref, atol=1e-5, rtol=1e-5), "mismatch vs reference"

    print("KERNEL_OK")
</pallas_src>

<mosaic_0001>
module attributes {stable_mosaic.version = 11 : i64} {
  func.func @kernel(%arg0: i32, %arg1: i32, %arg2: memref<1x4x1x128xf32, #tpu.memory_space<vmem>>, %arg3: memref<3x4xf32, #tpu.memory_space<smem>>, %arg4: memref<3xf32, #tpu.memory_space<smem>>, %arg5: memref<1x3x1x128xf32, #tpu.memory_space<vmem>>) attributes {dimension_semantics = [#tpu.dimension_semantics<parallel>, #tpu.dimension_semantics<parallel>], iteration_bounds = array<i64: 2, 1>, scalar_prefetch = 0 : i64, scratch_operands = 0 : i64, tpu.core_type = #tpu.core_type<tc>, window_params = [{transform_indices = @transform_0, window_bounds = array<i64: 1, 4, 1, 128>}, {transform_indices = @transform_1, window_bounds = array<i64: 3, 4>}, {transform_indices = @transform_2, window_bounds = array<i64: 3>}, {transform_indices = @transform_3, window_bounds = array<i64: 1, 3, 1, 128>}]} {
    %c0 = arith.constant 0 : index
    %c0_0 = arith.constant 0 : index
    %c0_1 = arith.constant 0 : index
    %c0_2 = arith.constant 0 : index
    %0 = vector.load %arg2[%c0, %c0_0, %c0_1, %c0_2] : memref<1x4x1x128xf32, #tpu.memory_space<vmem>>, vector<1x1x1x128xf32>
    %1 = vector.shape_cast %0 : vector<1x1x1x128xf32> to vector<1x128xf32>
    %c0_3 = arith.constant 0 : index
    %c1 = arith.constant 1 : index
    %c0_4 = arith.constant 0 : index
    %c0_5 = arith.constant 0 : index
    %2 = vector.load %arg2[%c0_3, %c1, %c0_4, %c0_5] : memref<1x4x1x128xf32, #tpu.memory_space<vmem>>, vector<1x1x1x128xf32>
    %3 = vector.shape_cast %2 : vector<1x1x1x128xf32> to vector<1x128xf32>
    %c0_6 = arith.constant 0 : index
    %c2 = arith.constant 2 : index
    %c0_7 = arith.constant 0 : index
    %c0_8 = arith.constant 0 : index
    %4 = vector.load %arg2[%c0_6, %c2, %c0_7, %c0_8] : memref<1x4x1x128xf32, #tpu.memory_space<vmem>>, vector<1x1x1x128xf32>
    %5 = vector.shape_cast %4 : vector<1x1x1x128xf32> to vector<1x128xf32>
    %c0_9 = arith.constant 0 : index
    %c3 = arith.constant 3 : index
    %c0_10 = arith.constant 0 : index
    %c0_11 = arith.constant 0 : index
    %6 = vector.load %arg2[%c0_9, %c3, %c0_10, %c0_11] : memref<1x4x1x128xf32, #tpu.memory_space<vmem>>, vector<1x1x1x128xf32>
    %7 = vector.shape_cast %6 : vector<1x1x1x128xf32> to vector<1x128xf32>
    %c0_12 = arith.constant 0 : index
    %c0_13 = arith.constant 0 : index
    %8 = memref.load %arg3[%c0_12, %c0_13] : memref<3x4xf32, #tpu.memory_space<smem>>
    %9 = vector.broadcast %8 : f32 to vector<1x128xf32>
    %10 = arith.mulf %1, %9 : vector<1x128xf32>
    %c0_14 = arith.constant 0 : index
    %c1_15 = arith.constant 1 : index
    %11 = memref.load %arg3[%c0_14, %c1_15] : memref<3x4xf32, #tpu.memory_space<smem>>
    %12 = vector.broadcast %11 : f32 to vector<1x128xf32>
    %13 = arith.mulf %3, %12 : vector<1x128xf32>
    %14 = arith.addf %10, %13 : vector<1x128xf32>
    %c0_16 = arith.constant 0 : index
    %c2_17 = arith.constant 2 : index
    %15 = memref.load %arg3[%c0_16, %c2_17] : memref<3x4xf32, #tpu.memory_space<smem>>
    %16 = vector.broadcast %15 : f32 to vector<1x128xf32>
    %17 = arith.mulf %5, %16 : vector<1x128xf32>
    %18 = arith.addf %14, %17 : vector<1x128xf32>
    %c0_18 = arith.constant 0 : index
    %c3_19 = arith.constant 3 : index
    %19 = memref.load %arg3[%c0_18, %c3_19] : memref<3x4xf32, #tpu.memory_space<smem>>
    %20 = vector.broadcast %19 : f32 to vector<1x128xf32>
    %21 = arith.mulf %7, %20 : vector<1x128xf32>
    %22 = arith.addf %18, %21 : vector<1x128xf32>
    %c0_20 = arith.constant 0 : index
    %23 = memref.load %arg4[%c0_20] : memref<3xf32, #tpu.memory_space<smem>>
    %24 = vector.broadcast %23 : f32 to vector<1x128xf32>
    %25 = arith.addf %22, %24 : vector<1x128xf32>
    %c0_21 = arith.constant 0 : index
    %c0_22 = arith.constant 0 : index
    %c0_23 = arith.constant 0 : index
    %c0_24 = arith.constant 0 : index
    %26 = vector.load %arg5[%c0_21, %c0_22, %c0_23, %c0_24] : memref<1x3x1x128xf32, #tpu.memory_space<vmem>>, vector<1x1x1x128xf32>
    %27 = vector.shape_cast %26 : vector<1x1x1x128xf32> to vector<1x128xf32>
    %28 = vector.shape_cast %25 : vector<1x128xf32> to vector<1x1x1x128xf32>
    tpu.vector_store %arg5[%c0_21, %c0_22, %c0_23, %c0_24], %28 {strides = array<i32>} : memref<1x3x1x128xf32, #tpu.memory_space<vmem>>, vector<1x1x1x128xf32>,
    %c1_25 = arith.constant 1 : index
    %c0_26 = arith.constant 0 : index
    %29 = memref.load %arg3[%c1_25, %c0_26] : memref<3x4xf32, #tpu.memory_space<smem>>
    %30 = vector.broadcast %29 : f32 to vector<1x128xf32>
    %31 = arith.mulf %1, %30 : vector<1x128xf32>
    %c1_27 = arith.constant 1 : index
    %c1_28 = arith.constant 1 : index
    %32 = memref.load %arg3[%c1_27, %c1_28] : memref<3x4xf32, #tpu.memory_space<smem>>
    %33 = vector.broadcast %32 : f32 to vector<1x128xf32>
    %34 = arith.mulf %3, %33 : vector<1x128xf32>
    %35 = arith.addf %31, %34 : vector<1x128xf32>
    %c1_29 = arith.constant 1 : index
    %c2_30 = arith.constant 2 : index
    %36 = memref.load %arg3[%c1_29, %c2_30] : memref<3x4xf32, #tpu.memory_space<smem>>
    %37 = vector.broadcast %36 : f32 to vector<1x128xf32>
    %38 = arith.mulf %5, %37 : vector<1x128xf32>
    %39 = arith.addf %35, %38 : vector<1x128xf32>
    %c1_31 = arith.constant 1 : index
    %c3_32 = arith.constant 3 : index
    %40 = memref.load %arg3[%c1_31, %c3_32] : memref<3x4xf32, #tpu.memory_space<smem>>
    %41 = vector.broadcast %40 : f32 to vector<1x128xf32>
    %42 = arith.mulf %7, %41 : vector<1x128xf32>
    %43 = arith.addf %39, %42 : vector<1x128xf32>
    %c1_33 = arith.constant 1 : index
    %44 = memref.load %arg4[%c1_33] : memref<3xf32, #tpu.memory_space<smem>>
    %45 = vector.broadcast %44 : f32 to vector<1x128xf32>
    %46 = arith.addf %43, %45 : vector<1x128xf32>
    %c0_34 = arith.constant 0 : index
    %c1_35 = arith.constant 1 : index
    %c0_36 = arith.constant 0 : index
    %c0_37 = arith.constant 0 : index
    %47 = vector.load %arg5[%c0_34, %c1_35, %c0_36, %c0_37] : memref<1x3x1x128xf32, #tpu.memory_space<vmem>>, vector<1x1x1x128xf32>
    %48 = vector.shape_cast %47 : vector<1x1x1x128xf32> to vector<1x128xf32>
    %49 = vector.shape_cast %46 : vector<1x128xf32> to vector<1x1x1x128xf32>
    tpu.vector_store %arg5[%c0_34, %c1_35, %c0_36, %c0_37], %49 {strides = array<i32>} : memref<1x3x1x128xf32, #tpu.memory_space<vmem>>, vector<1x1x1x128xf32>,
    %c2_38 = arith.constant 2 : index
    %c0_39 = arith.constant 0 : index
    %50 = memref.load %arg3[%c2_38, %c0_39] : memref<3x4xf32, #tpu.memory_space<smem>>
    %51 = vector.broadcast %50 : f32 to vector<1x128xf32>
    %52 = arith.mulf %1, %51 : vector<1x128xf32>
    %c2_40 = arith.constant 2 : index
    %c1_41 = arith.constant 1 : index
    %53 = memref.load %arg3[%c2_40, %c1_41] : memref<3x4xf32, #tpu.memory_space<smem>>
    %54 = vector.broadcast %53 : f32 to vector<1x128xf32>
    %55 = arith.mulf %3, %54 : vector<1x128xf32>
    %56 = arith.addf %52, %55 : vector<1x128xf32>
    %c2_42 = arith.constant 2 : index
    %c2_43 = arith.constant 2 : index
    %57 = memref.load %arg3[%c2_42, %c2_43] : memref<3x4xf32, #tpu.memory_space<smem>>
    %58 = vector.broadcast %57 : f32 to vector<1x128xf32>
    %59 = arith.mulf %5, %58 : vector<1x128xf32>
    %60 = arith.addf %56, %59 : vector<1x128xf32>
    %c2_44 = arith.constant 2 : index
    %c3_45 = arith.constant 3 : index
    %61 = memref.load %arg3[%c2_44, %c3_45] : memref<3x4xf32, #tpu.memory_space<smem>>
    %62 = vector.broadcast %61 : f32 to vector<1x128xf32>
    %63 = arith.mulf %7, %62 : vector<1x128xf32>
    %64 = arith.addf %60, %63 : vector<1x128xf32>
    %c2_46 = arith.constant 2 : index
    %65 = memref.load %arg4[%c2_46] : memref<3xf32, #tpu.memory_space<smem>>
    %66 = vector.broadcast %65 : f32 to vector<1x128xf32>
    %67 = arith.addf %64, %66 : vector<1x128xf32>
    %c0_47 = arith.constant 0 : index
    %c2_48 = arith.constant 2 : index
    %c0_49 = arith.constant 0 : index
    %c0_50 = arith.constant 0 : index
    %68 = vector.load %arg5[%c0_47, %c2_48, %c0_49, %c0_50] : memref<1x3x1x128xf32, #tpu.memory_space<vmem>>, vector<1x1x1x128xf32>
    %69 = vector.shape_cast %68 : vector<1x1x1x128xf32> to vector<1x128xf32>
    %70 = vector.shape_cast %67 : vector<1x128xf32> to vector<1x1x1x128xf32>
    tpu.vector_store %arg5[%c0_47, %c2_48, %c0_49, %c0_50], %70 {strides = array<i32>} : memref<1x3x1x128xf32, #tpu.memory_space<vmem>>, vector<1x1x1x128xf32>,
    return
  }
  func.func @transform_0(%arg0: i32, %arg1: i32) -> (i32, i32, i32, i32) {
    %c0_i32 = arith.constant 0 : i32
    %c0_i32_0 = arith.constant 0 : i32
    %c0_i32_1 = arith.constant 0 : i32
    return %arg0, %c0_i32, %arg1, %c0_i32_0 : i32, i32, i32, i32
  }
  func.func @transform_1(%arg0: i32, %arg1: i32) -> (i32, i32) {
    %c0_i32 = arith.constant 0 : i32
    %c0_i32_0 = arith.constant 0 : i32
    %c0_i32_1 = arith.constant 0 : i32
    return %c0_i32, %c0_i32_0 : i32, i32
  }
  func.func @transform_2(%arg0: i32, %arg1: i32) -> i32 {
    %c0_i32 = arith.constant 0 : i32
    %c0_i32_0 = arith.constant 0 : i32
    return %c0_i32 : i32
  }
  func.func @transform_3(%arg0: i32, %arg1: i32) -> (i32, i32, i32, i32) {
    %c0_i32 = arith.constant 0 : i32
    %c0_i32_0 = arith.constant 0 : i32
    %c0_i32_1 = arith.constant 0 : i32
    return %arg0, %c0_i32, %arg1, %c0_i32_0 : i32, i32, i32, i32
  }
}

</mosaic_0001>

<llo_original>
// kernel: tpu_custom_call.1
$region0: #{tpu_custom_call.1}
  #allocation0 [shape = 'u32[]', space=smem, size = 0x4, offset = 0x4, fixed_abs, tag = 'smem constant byte address 0x4 - core index']
  #allocation1 [shape = 'u32[144,128]{1,0:T(1,128)}', space=vmem, size = 0x12000, scoped, tag = 'internal scratch']
  %s0 = inlined_call_operand.hbm [shape: f32[2,4,1,128], index: 0, kind: input, shape index: {}]
  %s1 = inlined_call_operand.hbm [shape: f32[3,4], index: 1, kind: input, shape index: {}]
  %s2 = inlined_call_operand.vmem [shape: f32[3], index: 2, kind: input, shape index: {}]
  %s3 = inlined_call_operand.hbm [shape: f32[2,3,1,128], index: 3, kind: output, shape index: {}]
  %s4 = sld [smem:[#allocation0]]
  $region57: #{tpu_custom_call.1} parent=0
    _
  %s6 = ssub.s32 1, %s4
  %s7 = scalar_select 0, %s6, %s4
  $region1: #{tpu_custom_call.1} parent=0
    #allocation2 [shape = 'u8[4096]{0}', space=vmem, size = 0x1000, scoped, tag = 'input window, operand 0']
    #allocation3 [shape = 's32[2]{0}', space=sflag, size = 0x8, scoped, tag = 'scoped memory for tpu_custom_call.1']
    #allocation4 [shape = 's32[2]{0}', space=sflag, size = 0x8, scoped, tag = 'scoped memory for tpu_custom_call.1']
    #allocation5 [shape = 's32[2]{0}', space=sflag, size = 0x8, scoped, tag = 'scoped memory for tpu_custom_call.1']
    #allocation6 [shape = 's32[2]{0}', space=sflag, size = 0x8, scoped, tag = 'scoped memory for tpu_custom_call.1']
    #allocation7 [shape = 'u8[2048]{0}', space=smem, size = 0x800, scoped, tag = 'input window, operand 1, single buffered']
    #allocation8 [shape = 'u8[512]{0}', space=smem, size = 0x200, scoped, tag = 'input window, operand 2, single buffered']
    #allocation9 [shape = 'u8[3072]{0}', space=vmem, size = 0xc00, scoped, tag = 'output window, operand 0']
    %8 = vsyncpa [#allocation3], 0
    %s9 = scalar_lea.sflag [#allocation3], 1
    %10 = vsyncpa %s9, 0
    %11 = vsyncpa [#allocation5], 0
    %12 = vsyncpa [#allocation6], 0
    %13 = vsyncpa [#allocation4], 0
    %s14 = scalar_lea.sflag [#allocation4], 1
    %15 = vsyncpa %s14, 0
    loop: start=0, step=1, limit=4
    $region2: #{tpu_custom_call.1} parent=1 // loop_pre_header
      _
    $region3: #{tpu_custom_call.1} parent=1 // loop_header
      %s17 = sphi 0, %s21
      %p18 = scmp.ge.s32.totalorder %s17, 4
      %s24 = sphi 0, %s36
      %s25 = sphi 0, %s32
      %s26 = sphi 0, %s24
      %s27 = sphi 0, %s25
      %s28 = sphi 0, %s26
      %s29 = sphi 0, %s27
      %s41 = sphi 0, %s43
      %s44 = sphi 0, %s41
      %s45 = sphi 0, %s44
      %s61 = sphi 0, %s45
      %s65 = sphi 0, %s65
      %s67 = sphi 0, %s65
      %s68 = sphi 0, %s67
      %s82 = sphi 0, %s68
      %s86 = sphi 0, %s86
      %s88 = sphi 0, %s86
      %s89 = sphi 0, %s88
      %s103 = sphi 0, %s89
      %s111 = sphi 0, %s113
      %s114 = sphi 0, %s111
      %s115 = sphi 0, %s114
      %s131 = sphi 0, %s115
    $region4: #{tpu_custom_call.1} parent=1 // loop_header_branch
      %20 = sbr.rel (%p18) target = $region8
    $region5: #{tpu_custom_call.1} parent=1 // loop_body
      %s22 = ssub.s32 %s17, 1
      %s23 = ssub.s32 %s17, 2
      %s30 = sadd.s32 1, %s25
      %p31 = scmp.ge.s32.totalorder %s30, 1
      %s32 = scalar_select %p31, 0, %s30
      %s33 = sadd.s32 1, %s24
      %s34 = scalar_select %p31, %s33, %s24
      %p35 = scmp.ge.s32.totalorder %s34, 2
      %s36 = scalar_select %p35, 0, %s34
      %s37 = ssub.s32 %s24, %s36
      %s38 = ssub.s32 %s25, %s32
      %s39 = sor.u32 %s37, %s38
      %p40 = scmp.eq.s32.totalorder %s39, 0
      %s42 = sadd.s32 %s41, 1
      %s43 = scalar_select %p40, %s41, %s42
      %p46 = pneg %p40
      %p47 = scmp.eq.s32.totalorder %s17, 1
      %p48 = por %p46, %p47
      %p49 = scmp.ne.s32.totalorder %s41, %s44
      %p50 = scmp.eq.s32.totalorder %s17, 0
      %p51 = por %p49, %p50
      %p52 = scmp.ne.s32.totalorder %s41, %s44
      %p53 = scmp.eq.s32.totalorder %s22, 1
      %p54 = por %p52, %p53
      %p55 = scmp.ne.s32.totalorder %s44, %s45
      %p56 = scmp.eq.s32.totalorder %s22, 0
      %p57 = por %p55, %p56
      %p58 = scmp.ne.s32.totalorder %s44, %s45
      %p59 = scmp.eq.s32.totalorder %s23, 1
      %p60 = por %p58, %p59
      %p62 = scmp.ne.s32.totalorder %s45, %s61
      %p63 = scmp.eq.s32.totalorder %s23, 0
      %p64 = por %p62, %p63
      %s66 = sadd.s32 %s65, 1
      %p69 = scmp.eq.s32.totalorder %s17, 1
      %p70 = scmp.ne.s32.totalorder %s65, %s67
      %p71 = scmp.eq.s32.totalorder %s17, 0
      %p72 = por %p70, %p71
      %p73 = scmp.ne.s32.totalorder %s65, %s67
      %p74 = scmp.eq.s32.totalorder %s22, 1
      %p75 = por %p73, %p74
      %p76 = scmp.ne.s32.totalorder %s67, %s68
      %p77 = scmp.eq.s32.totalorder %s22, 0
      %p78 = por %p76, %p77
      %p79 = scmp.ne.s32.totalorder %s67, %s68
      %p80 = scmp.eq.s32.totalorder %s23, 1
      %p81 = por %p79, %p80
      %p83 = scmp.ne.s32.totalorder %s68, %s82
      %p84 = scmp.eq.s32.totalorder %s23, 0
      %p85 = por %p83, %p84
      %s87 = sadd.s32 %s86, 1
      %p90 = scmp.eq.s32.totalorder %s17, 1
      %p91 = scmp.ne.s32.totalorder %s86, %s88
      %p92 = scmp.eq.s32.totalorder %s17, 0
      %p93 = por %p91, %p92
      %p94 = scmp.ne.s32.totalorder %s86, %s88
      %p95 = scmp.eq.s32.totalorder %s22, 1
      %p96 = por %p94, %p95
      %p97 = scmp.ne.s32.totalorder %s88, %s89
      %p98 = scmp.eq.s32.totalorder %s22, 0
      %p99 = por %p97, %p98
      %p100 = scmp.ne.s32.totalorder %s88, %s89
      %p101 = scmp.eq.s32.totalorder %s23, 1
      %p102 = por %p100, %p101
      %p104 = scmp.ne.s32.totalorder %s89, %s103
      %p105 = scmp.eq.s32.totalorder %s23, 0
      %p106 = por %p104, %p105
      %s107 = ssub.s32 %s24, %s36
      %s108 = ssub.s32 %s25, %s32
      %s109 = sor.u32 %s107, %s108
      %p110 = scmp.eq.s32.totalorder %s109, 0
      %s112 = sadd.s32 %s111, 1
      %s113 = scalar_select %p110, %s111, %s112
      %p116 = pneg %p110
      %p117 = scmp.eq.s32.totalorder %s17, 1
      %p118 = por %p116, %p117
      %p119 = scmp.ne.s32.totalorder %s111, %s114
      %p120 = scmp.eq.s32.totalorder %s17, 0
      %p121 = por %p119, %p120
      %p122 = scmp.ne.s32.totalorder %s111, %s114
      %p123 = scmp.eq.s32.totalorder %s22, 1
      %p124 = por %p122, %p123
      %p125 = scmp.ne.s32.totalorder %s114, %s115
      %p126 = scmp.eq.s32.totalorder %s22, 0
      %p127 = por %p125, %p126
      %p128 = scmp.ne.s32.totalorder %s114, %s115
      %p129 = scmp.eq.s32.totalorder %s23, 1
      %p130 = por %p128, %p129
      %p132 = scmp.ne.s32.totalorder %s115, %s131
      %p133 = scmp.eq.s32.totalorder %s23, 0
      %p134 = por %p132, %p133
      %p135 = scmp.le.s32.totalorder 1, %s17
      %p136 = scmp.lt.s32.totalorder %s17, 3
      %p137 = pnand %p135, %p136
      %p138 = pneg %p137
      // Predicated region
      $region9: #{tpu_custom_call.1} parent=5 // pred_check
        _
      $region10: #{tpu_custom_call.1} parent=5 // pred_check_branch
        %140 = sbr.rel (%p137) target = $region12
      $region11: #{tpu_custom_call.1} parent=5 // pred_region
        %s141 = ssub.s32 %s17, 1
        // Predicated region
        $region13: #{tpu_custom_call.1} parent=11 // pred_check
          %p142 = pneg %p78
        $region14: #{tpu_custom_call.1} parent=11 // pred_check_branch
          %144 = sbr.rel (%p142) target = $region16
        $region15: #{tpu_custom_call.1} parent=11 // pred_region
          %s146 = ssub.s32 64, 64
          %147 = vsyncadd [#allocation5], %s146
          %150 = dma.hbm_to_smem %s1, 64, [#allocation7], [#allocation5]
        $region16: #{tpu_custom_call.1} parent=11 // pred_fallthru
          _
        // Predicated region
        $region17: #{tpu_custom_call.1} parent=11 // pred_check
          %p151 = pneg %p99
        $region18: #{tpu_custom_call.1} parent=11 // pred_check_branch
          %153 = sbr.rel (%p151) target = $region20
        $region19: #{tpu_custom_call.1} parent=11 // pred_region
          %s155 = ssub.s32 16, 16
          %156 = vsyncadd [#allocation6], %s155
          %s158 = sshll.u32 %s2, 4
          %s159 = int_to_ptr.vmem [resolvable:$true] %s158
          %161 = dma.vmem_to_smem %s159, 16, [#allocation8], [#allocation6]
        $region20: #{tpu_custom_call.1} parent=11 // pred_fallthru
          _
      $region12: #{tpu_custom_call.1} parent=5 // pred_fallthru
        _
      %p162 = scmp.lt.s32.totalorder %s17, 2
      // Predicated region
      $region21: #{tpu_custom_call.1} parent=5 // pred_check
        %p163 = pneg %p162
      $region22: #{tpu_custom_call.1} parent=5 // pred_check_branch
        %165 = sbr.rel (%p163) target = $region24
      $region23: #{tpu_custom_call.1} parent=5 // pred_region
        // Predicated region
        $region25: #{tpu_custom_call.1} parent=23 // pred_check
          %p166 = pneg %p51
        $region26: #{tpu_custom_call.1} parent=23 // pred_check_branch
          %168 = sbr.rel (%p166) target = $region28
        $region27: #{tpu_custom_call.1} parent=23 // pred_region
          %s169 = sand.u32 %s41, 1
          %s170 = scalar_lea.sflag [#allocation3], %s169
          %s171 = sand.u32 %s41, 1
          %s172 = smul.addr %s171, 4
          %s173 = scalar_lea.vmem [#allocation2], %s172
          %s175 = ssub.s32 64, 64
          %176 = vsyncadd %s170, %s175
          %s177 = smul.addr %s24, 4
          %s178 = sadd.s32 %s25, %s177
          %s179 = smul.addr %s178, 16
          %s180 = scalar_lea.hbm %s0, %s179
          %s181 = sshll.u32 %s173, 4
          %s182 = int_to_ptr.vmem [resolvable:$true] %s181
          %187 = dma.hbm_to_vmem [thread:$0]  %s180, 64, %s182, %s170, 16, 16, 1
        $region28: #{tpu_custom_call.1} parent=23 // pred_fallthru
          _
      $region24: #{tpu_custom_call.1} parent=5 // pred_fallthru
        _
      %p188 = scmp.le.s32.totalorder 1, %s17
      %p189 = scmp.lt.s32.totalorder %s17, 3
      %p190 = pnand %p188, %p189
      %p191 = pneg %p190
      // Predicated region
      $region29: #{tpu_custom_call.1} parent=5 // pred_check
        _
      $region30: #{tpu_custom_call.1} parent=5 // pred_check_branch
        %193 = sbr.rel (%p190) target = $region32
      $region31: #{tpu_custom_call.1} parent=5 // pred_region
        %s194 = ssub.s32 %s17, 1
        %s195 = sand.u32 %s44, 1
        %s196 = scalar_lea.sflag [#allocation3], %s195
        %s197 = sand.u32 %s44, 1
        %s198 = smul.addr %s197, 4
        %s199 = scalar_lea.vmem [#allocation2], %s198
        // Predicated region
        $region33: #{tpu_custom_call.1} parent=31 // pred_check
          %p200 = pneg %p57
        $region34: #{tpu_custom_call.1} parent=31 // pred_check_branch
          %202 = sbr.rel (%p200) target = $region36
        $region35: #{tpu_custom_call.1} parent=31 // pred_region
          %203 = dma.done %s196, 64
        $region36: #{tpu_custom_call.1} parent=31 // pred_fallthru
          _
        // Predicated region
        $region37: #{tpu_custom_call.1} parent=31 // pred_check
          %p204 = pneg %p78
        $region38: #{tpu_custom_call.1} parent=31 // pred_check_branch
          %206 = sbr.rel (%p204) target = $region40
        $region39: #{tpu_custom_call.1} parent=31 // pred_region
          %207 = dma.done [#allocation5], 64
        $region40: #{tpu_custom_call.1} parent=31 // pred_fallthru
          _
        // Predicated region
        $region41: #{tpu_custom_call.1} parent=31 // pred_check
          %p208 = pneg %p99
        $region42: #{tpu_custom_call.1} parent=31 // pred_check_branch
          %210 = sbr.rel (%p208) target = $region44
        $region43: #{tpu_custom_call.1} parent=31 // pred_region
          %211 = dma.done [#allocation6], 16
        $region44: #{tpu_custom_call.1} parent=31 // pred_fallthru
          _
        %212 = sfence
        %s213 = sand.u32 %s44, 1
        %s214 = scalar_lea.sflag [#allocation3], %s213
        %s215 = sand.u32 %s44, 1
        %s216 = smul.addr %s215, 4
        %s217 = scalar_lea.vmem [#allocation2], %s216
        %p218 = pneg %p57
        %p219 = pneg %p54
        %p220 = pneg %p78
        %p221 = pneg %p75
        %p222 = pneg %p99
        %p223 = pneg %p96
        %p224 = pneg %p127
        %p225 = pneg %p124
        %s226 = sand.u32 %s114, 1
        %s227 = scalar_lea.sflag [#allocation4], %s226
        %s228 = sand.u32 %s114, 1
        %s229 = smul.addr %s228, 3
        %s230 = scalar_lea.vmem [#allocation9], %s229
        %v231 = vld [vmem:[%s199] sm:$0x1]
        %s232 = scalar_lea.vmem %s199, 1 [#allocation2]
        %v233 = vld [vmem:[%s232] sm:$0x1]
        %s234 = scalar_lea.vmem %s199, 2 [#allocation2]
        %v235 = vld [vmem:[%s234] sm:$0x1]
        %s236 = scalar_lea.vmem %s199, 3 [#allocation2]
        %v237 = vld [vmem:[%s236] sm:$0x1]
        %s238 = sld [smem:[#allocation7]]
        %v239 = vstv %s238
        %v240 = vmul.f32 %v231, %v239
        %s241 = sld [smem:[#allocation7 + $0x1]]
        %v242 = vstv %s241
        %v243 = vmul.f32 %v233, %v242
        %v244 = vadd.f32 %v240, %v243
        %s245 = sld [smem:[#allocation7 + $0x2]]
        %v246 = vstv %s245
        %v247 = vmul.f32 %v235, %v246
        %v248 = vadd.f32 %v244, %v247
        %s249 = sld [smem:[#allocation7 + $0x3]]
        %v250 = vstv %s249
        %v251 = vmul.f32 %v237, %v250
        %v252 = vadd.f32 %v248, %v251
        %s253 = sld [smem:[#allocation8]]
        %v254 = vstv %s253
        %v255 = vadd.f32 %v252, %v254
        %256 = vst [vmem:[%s230] sm:$0x1] %v255
        %s257 = sld [smem:[#allocation7 + $0x80]]
        %v258 = vstv %s257
        %v259 = vmul.f32 %v231, %v258
        %s260 = sld [smem:[#allocation7 + $0x81]]
        %v261 = vstv %s260
        %v262 = vmul.f32 %v233, %v261
        %v263 = vadd.f32 %v259, %v262
        %s264 = sld [smem:[#allocation7 + $0x82]]
        %v265 = vstv %s264
        %v266 = vmul.f32 %v235, %v265
        %v267 = vadd.f32 %v263, %v266
        %s268 = sld [smem:[#allocation7 + $0x83]]
        %v269 = vstv %s268
        %v270 = vmul.f32 %v237, %v269
        %v271 = vadd.f32 %v267, %v270
        %s272 = sld [smem:[#allocation8 + $0x1]]
        %v273 = vstv %s272
        %v274 = vadd.f32 %v271, %v273
        %s275 = scalar_lea.vmem %s230, 1 [#allocation9]
        %276 = vst [vmem:[%s275] sm:$0x1] %v274
        %s277 = sld [smem:[#allocation7 + $0x100]]
        %v278 = vstv %s277
        %v279 = vmul.f32 %v231, %v278
        %s280 = sld [smem:[#allocation7 + $0x101]]
        %v281 = vstv %s280
        %v282 = vmul.f32 %v233, %v281
        %v283 = vadd.f32 %v279, %v282
        %s284 = sld [smem:[#allocation7 + $0x102]]
        %v285 = vstv %s284
        %v286 = vmul.f32 %v235, %v285
        %v287 = vadd.f32 %v283, %v286
        %s288 = sld [smem:[#allocation7 + $0x103]]
        %v289 = vstv %s288
        %v290 = vmul.f32 %v237, %v289
        %v291 = vadd.f32 %v287, %v290
        %s292 = sld [smem:[#allocation8 + $0x2]]
        %v293 = vstv %s292
        %v294 = vadd.f32 %v291, %v293
        %s295 = scalar_lea.vmem %s230, 2 [#allocation9]
        %296 = vst [vmem:[%s295] sm:$0x1] %v294
        %s297 = sand.u32 %s114, 1
        %s298 = scalar_lea.sflag [#allocation4], %s297
        %s299 = sand.u32 %s114, 1
        %s300 = smul.addr %s299, 3
        %s301 = scalar_lea.vmem [#allocation9], %s300
        // Predicated region
        $region45: #{tpu_custom_call.1} parent=31 // pred_check
          %p302 = pneg %p124
        $region46: #{tpu_custom_call.1} parent=31 // pred_check_branch
          %304 = sbr.rel (%p302) target = $region48
        $region47: #{tpu_custom_call.1} parent=31 // pred_region
          %s306 = ssub.s32 48, 48
          %307 = vsyncadd %s298, %s306
          %s308 = smul.addr %s26, 3
          %s309 = sadd.s32 %s27, %s308
          %s310 = smul.addr %s309, 16
          %s311 = scalar_lea.hbm %s3, %s310
          %s312 = sshll.u32 %s301, 4
          %s313 = int_to_ptr.vmem [resolvable:$true] %s312
          %318 = dma.vmem_to_hbm [thread:$0]  %s313, 48, %s311, %s298, 16, 16, 1
        $region48: #{tpu_custom_call.1} parent=31 // pred_fallthru
          _
      $region32: #{tpu_custom_call.1} parent=5 // pred_fallthru
        _
      %p319 = scmp.le.s32.totalorder 2, %s17
      // Predicated region
      $region49: #{tpu_custom_call.1} parent=5 // pred_check
        %p320 = pneg %p319
      $region50: #{tpu_custom_call.1} parent=5 // pred_check_branch
        %322 = sbr.rel (%p320) target = $region52
      $region51: #{tpu_custom_call.1} parent=5 // pred_region
        %s323 = ssub.s32 %s17, 2
        // Predicated region
        $region53: #{tpu_custom_call.1} parent=51 // pred_check
          %p324 = pneg %p130
        $region54: #{tpu_custom_call.1} parent=51 // pred_check_branch
          %326 = sbr.rel (%p324) target = $region56
        $region55: #{tpu_custom_call.1} parent=51 // pred_region
          %s327 = sand.u32 %s115, 1
          %s328 = scalar_lea.sflag [#allocation4], %s327
          %s329 = sand.u32 %s115, 1
          %s330 = smul.addr %s329, 3
          %s331 = scalar_lea.vmem [#allocation9], %s330
          %332 = dma.done %s328, 48
        $region56: #{tpu_custom_call.1} parent=51 // pred_fallthru
          _
      $region52: #{tpu_custom_call.1} parent=5 // pred_fallthru
        _
    $region6: #{tpu_custom_call.1} parent=1 // loop_footer
      %s21 = sadd.s32 1, %s17
    $region7: #{tpu_custom_call.1} parent=1 // loop_footer_branch
      %16 = sbr.rel target = $region3
    $region8: #{tpu_custom_call.1} parent=1 // loop_exit
      _
    %333 = vsyncpa [#allocation3], 1
    %s334 = scalar_lea.sflag [#allocation3], 1
    %335 = vsyncpa %s334, 1
    %336 = vsyncpa [#allocation4], 1
    %s337 = scalar_lea.sflag [#allocation4], 1
    %338 = vsyncpa %s337, 1
    %339 = vsyncpa [#allocation5], 1
    %s340 = scalar_lea.sflag [#allocation5], 1
    %341 = vsyncpa %s340, 1
    %342 = vsyncpa [#allocation6], 1
    %s343 = scalar_lea.sflag [#allocation6], 1
    %344 = vsyncpa %s343, 1

</llo_original>
